<compile_context>
chip_gen: v5e
topology: v5e:2x2
jax: 0.10.0
libtpu: 0.0.40
codegen_flags: <defaults>
</compile_context>

<pallas_src>
import jax
import jax.numpy as jnp
from jax.experimental import pallas as pl
from jax.experimental.pallas import tpu as pltpu

_LANES = 128


def _linear_kernel(w_ref, b_ref, x_ref, o_ref):
    # y = x * w + b ; w/b are SMEM scalars (in_features = out_features = 1),
    # x/o are lane-dense (rows, 128) VMEM tiles.
    w = w_ref[0]
    b = b_ref[0]
    o_ref[...] = x_ref[...] * w + b


def linear_regression_model2(x: jnp.ndarray, weight: jnp.ndarray, bias: jnp.ndarray) -> jnp.ndarray:
    """x: [N, 1] f32, weight: [1, 1] f32, bias: [1] f32 -> [N, 1] f32 (== nn.Linear(1,1))."""
    n, f_in = x.shape
    assert f_in == 1 and weight.shape == (1, 1) and bias.shape == (1,)

    # Lane-dense repack: [N, 1] -> pad to multiple of 128 -> (rows, 128).
    n_pad = ((n + _LANES - 1) // _LANES) * _LANES
    rows = n_pad // _LANES
    x2d = jnp.pad(x.reshape(-1), (0, n_pad - n)).reshape(rows, _LANES)

    # Scalars for SMEM.
    w_s = weight.reshape(1)
    b_s = bias.reshape(1)

    y2d = pl.pallas_call(
        _linear_kernel,
        out_shape=jax.ShapeDtypeStruct((rows, _LANES), x.dtype),
        in_specs=[
            pl.BlockSpec(memory_space=pltpu.MemorySpace.SMEM),  # weight scalar
            pl.BlockSpec(memory_space=pltpu.MemorySpace.SMEM),  # bias scalar
            # Single block == full array shape, so no (8,128) divisibility issue.
            pl.BlockSpec((rows, _LANES), lambda: (0, 0)),
        ],
        out_specs=pl.BlockSpec((rows, _LANES), lambda: (0, 0)),
    )(w_s, b_s, x2d)

    # Back to the nn.Linear output layout [N, 1].
    return y2d.reshape(-1)[:n].reshape(n, 1)


if __name__ == "__main__":
    # Same input the original script builds: torch.arange(0, 1, 0.02).unsqueeze(1) -> [50, 1]
    x = jnp.arange(0.0, 1.0, 0.02, dtype=jnp.float32).reshape(-1, 1)

    # Deterministic parameter init (nn.Linear(1,1) shapes): uniform(-1, 1), matching
    # PyTorch's kaiming-uniform bound 1/sqrt(in_features)=1 for in_features=1.
    key = jax.random.PRNGKey(0)
    kw, kb = jax.random.split(key)
    weight = jax.random.uniform(kw, (1, 1), jnp.float32, minval=-1.0, maxval=1.0)
    bias = jax.random.uniform(kb, (1,), jnp.float32, minval=-1.0, maxval=1.0)

    y = linear_regression_model2(x, weight, bias)
    jax.block_until_ready(y)

    # Correctness check against plain JAX reference.
    y_ref = x @ weight.T + bias
    assert y.shape == (50, 1)
    assert jnp.allclose(y, y_ref, atol=1e-6), "mismatch vs reference"
    print("KERNEL_OK")
</pallas_src>

<mosaic_0001>
module attributes {stable_mosaic.version = 11 : i64} {
  func.func @_linear_kernel(%arg0: memref<1xf32, #tpu.memory_space<smem>>, %arg1: memref<1xf32, #tpu.memory_space<smem>>, %arg2: memref<1x128xf32, #tpu.memory_space<vmem>>, %arg3: memref<1x128xf32, #tpu.memory_space<vmem>>) attributes {dimension_semantics = [], scalar_prefetch = 0 : i64, scratch_operands = 0 : i64, tpu.core_type = #tpu.core_type<tc>} {
    %c0 = arith.constant 0 : index
    %0 = memref.load %arg0[%c0] : memref<1xf32, #tpu.memory_space<smem>>
    %c0_0 = arith.constant 0 : index
    %1 = memref.load %arg1[%c0_0] : memref<1xf32, #tpu.memory_space<smem>>
    %c0_1 = arith.constant 0 : index
    %c0_2 = arith.constant 0 : index
    %2 = vector.load %arg2[%c0_1, %c0_2] : memref<1x128xf32, #tpu.memory_space<vmem>>, vector<1x128xf32>
    %3 = vector.broadcast %0 : f32 to vector<1x128xf32>
    %4 = arith.mulf %2, %3 : vector<1x128xf32>
    %5 = vector.broadcast %1 : f32 to vector<1x128xf32>
    %6 = arith.addf %4, %5 : vector<1x128xf32>
    %c0_3 = arith.constant 0 : index
    %c0_4 = arith.constant 0 : index
    %7 = vector.load %arg3[%c0_3, %c0_4] : memref<1x128xf32, #tpu.memory_space<vmem>>, vector<1x128xf32>
    tpu.vector_store %arg3[%c0_3, %c0_4], %6 {strides = array<i32>} : memref<1x128xf32, #tpu.memory_space<vmem>>, vector<1x128xf32>,
    return
  }
}

</mosaic_0001>

<llo_original>
// kernel: tpu_custom_call.1
$region0: #{tpu_custom_call.1}
  #allocation0 [shape = 'u32[]', space=smem, size = 0x4, offset = 0x4, fixed_abs, tag = 'smem constant byte address 0x4 - core index']
  #allocation1 [shape = 'u32[72,128]{1,0:T(1,128)}', space=vmem, size = 0x9000, scoped, tag = 'internal scratch']
  #allocation2 [shape = 'f32[1]{0:T(128)S(6)}', space=smem, size = 0x200, scoped, tag = 'scoped memory for tpu_custom_call.1']
  #allocation3 [shape = 'f32[1]{0:T(128)S(6)}', space=smem, size = 0x200, scoped, tag = 'scoped memory for tpu_custom_call.1']
  %s0 = inlined_call_operand.<no memory space> [shape: f32[1], index: 0, kind: input, shape index: {}]
  %s1 = inlined_call_operand.<no memory space> [shape: f32[1], index: 1, kind: input, shape index: {}]
  %s2 = inlined_call_operand.vmem [shape: f32[1,128], index: 2, kind: input, shape index: {}]
  %s3 = inlined_call_operand.hbm [shape: f32[1,128], index: 3, kind: output, shape index: {}]
  %s4 = sld [smem:[#allocation0]]
  $region22: #{tpu_custom_call.1} parent=0
    _
  %s6 = ssub.s32 1, %s4
  %s7 = scalar_select 0, %s6, %s4
  %8 = sst [smem:[#allocation2]] %s0
  %9 = sst [smem:[#allocation3]] %s1
  $region1: #{tpu_custom_call.1} parent=0
    #allocation4 [shape = 'u8[512]{0}', space=vmem, size = 0x400, scoped, tag = 'output window, operand 0, single buffered']
    #allocation5 [shape = 's32[1]{0}', space=sflag, size = 0x4, scoped, tag = 'scoped memory for tpu_custom_call.1']
    %10 = vsyncpa [#allocation5], 0
    // Predicated region
    $region2: #{tpu_custom_call.1} parent=1 // pred_check
      _
    $region3: #{tpu_custom_call.1} parent=1 // pred_check_branch
      %12 = sbr.rel (0) target = $region5
    $region4: #{tpu_custom_call.1} parent=1 // pred_region
      _
    $region5: #{tpu_custom_call.1} parent=1 // pred_fallthru
      _
    // Predicated region
    $region6: #{tpu_custom_call.1} parent=1 // pred_check
      _
    $region7: #{tpu_custom_call.1} parent=1 // pred_check_branch
      %14 = sbr.rel (0) target = $region9
    $region8: #{tpu_custom_call.1} parent=1 // pred_region
      _
    $region9: #{tpu_custom_call.1} parent=1 // pred_fallthru
      _
    // Predicated region
    $region10: #{tpu_custom_call.1} parent=1 // pred_check
      _
    $region11: #{tpu_custom_call.1} parent=1 // pred_check_branch
      %16 = sbr.rel (0) target = $region13
    $region12: #{tpu_custom_call.1} parent=1 // pred_region
      _
    $region13: #{tpu_custom_call.1} parent=1 // pred_fallthru
      _
    %s17 = sld [smem:[#allocation2]]
    %s18 = sld [smem:[#allocation3]]
    %v19 = vld [vmem:[%s2] sm:$0x1]
    %v20 = vstv %s17
    %v21 = vmul.f32 %v19, %v20
    %v22 = vstv %s18
    %v23 = vadd.f32 %v21, %v22
    %24 = vst [vmem:[#allocation4] sm:$0x1] %v23
    // Predicated region
    $region14: #{tpu_custom_call.1} parent=1 // pred_check
      _
    $region15: #{tpu_custom_call.1} parent=1 // pred_check_branch
      %26 = sbr.rel (0) target = $region17
    $region16: #{tpu_custom_call.1} parent=1 // pred_region
      %28 = vsyncadd [#allocation5], 0
      %s30 = sshll.u32 [#allocation4], 4
      %s31 = int_to_ptr.vmem [resolvable:$true] %s30
      %s32 = sshll.u32 %s3, 4
      %s33 = int_to_ptr.hbm [resolvable:$true] %s32
      %35 = dma.vmem_to_hbm [thread:$0]  %s31, 16, %s33, [#allocation5]
    $region17: #{tpu_custom_call.1} parent=1 // pred_fallthru
      _
    // Predicated region
    $region18: #{tpu_custom_call.1} parent=1 // pred_check
      _
    $region19: #{tpu_custom_call.1} parent=1 // pred_check_branch
      %37 = sbr.rel (0) target = $region21
    $region20: #{tpu_custom_call.1} parent=1 // pred_region
      %39 = dma.done [#allocation5], 16
    $region21: #{tpu_custom_call.1} parent=1 // pred_fallthru
      _
    %40 = vsyncpa [#allocation5], 1

</llo_original>
